<compile_context>
chip_gen: v6e
topology: v6e:2x2x1
jax: 0.10.0
libtpu: 0.0.40
codegen_flags: <defaults>
</compile_context>

<pallas_src>
import functools

import jax
import jax.numpy as jnp
from jax.experimental import pallas as pl
from jax.experimental.pallas import tpu as pltpu


def _round_up(x, m):
    return ((x + m - 1) // m) * m


def _tpu_vmem_bytes():
    """Physical VMEM per TensorCore, with a conservative (v7x) fallback."""
    try:
        return int(pltpu.get_tpu_info().vmem_capacity_bytes)
    except Exception:
        return 64 * 1024 * 1024


def _vmem_limit_bytes(cap):
    # Leave headroom for compiler-internal scratch: ~112 MiB on 128-MiB parts
    # (v5e/v6e), ~56 MiB on 64-MiB/TC parts (v7x).
    headroom = max(8 * 1024 * 1024, cap // 8)
    return int(cap - headroom)


def _mlp_kernel(x_ref, wgu_ref, wd_ref, o_ref, acc_ref, *, tn):
    # x_ref:   (tm, H)      token-row tile (constant along the I grid axis)
    # wgu_ref: (H, 2*tn)    fused [gate_j | up_j] weight tile, (in, out) layout
    # wd_ref:  (tn, H)      down_proj weight tile, (in, out) layout
    # o_ref:   (tm, H)
    # acc_ref: (tm, H) f32  partial-sum accumulator over the I axis
    j = pl.program_id(1)

    x = x_ref[...]
    # One fused MXU matmul for gate & up -> (tm, 2*tn), f32 accumulation.
    gu = jnp.dot(x, wgu_ref[...], preferred_element_type=jnp.float32)
    gate = gu[:, :tn]
    up = gu[:, tn:]
    # SiLU in f32: g * sigmoid(g), then * up.
    h = (gate * jax.nn.sigmoid(gate)) * up
    # down_proj partial product for this I slice (f32 accumulation on the MXU).
    partial = jnp.dot(h.astype(wd_ref.dtype), wd_ref[...],
                      preferred_element_type=jnp.float32)

    # First I tile stores directly (saves a (tm,H) f32 zero-fill + extra RMW pass).
    @pl.when(j == 0)
    def _():
        acc_ref[...] = partial

    @pl.when(j > 0)
    def _():
        acc_ref[...] += partial

    @pl.when(j == pl.num_programs(1) - 1)
    def _():
        o_ref[...] = acc_ref[...].astype(o_ref.dtype)


def prepare_buding_mlp_weights(gate_w, up_w, down_w, *, tn=None,
                               compute_dtype=None):
    """Rearrange PyTorch nn.Linear weights (out, in) into the kernel layout.

    Call ONCE at model init (not per forward) so no per-call transposes /
    extra HBM weight round-trips happen under jit.

    Returns (wgu, wd_t, tn):
      wgu:  (nI, H, 2*tn)  tile j = [gate cols j | up cols j] in (in, out) layout
      wd_t: (I_pad, H)     down_proj in (in, out) layout, zero-padded along I
    Zero-padding of I is exact: padded gate cols give silu(0)*up = 0 so the
    padded rows of wd_t contribute nothing.

    compute_dtype=jnp.bfloat16 is strongly recommended for real model sizes
    (mandatory on v7x, where f32 weight tiles do not fit the 64 MiB VMEM).
    """
    inter, hidden = gate_w.shape
    assert up_w.shape == (inter, hidden)
    assert down_w.shape == (hidden, inter)

    if compute_dtype is not None:
        gate_w = gate_w.astype(compute_dtype)
        up_w = up_w.astype(compute_dtype)
        down_w = down_w.astype(compute_dtype)

    if tn is None:
        # Per-generation I-tile width: 512 on v5e/v6e (128 MiB VMEM), 256 on
        # v7x (64 MiB/TC) so the freed VMEM can be spent on a bigger tm.
        tn = 512 if _tpu_vmem_bytes() >= 96 * 1024 * 1024 else 256
    tn = min(tn, inter)
    inter_pad = _round_up(inter, tn)
    pad = inter_pad - inter

    gate_t = gate_w.T          # (H, I)
    up_t = up_w.T              # (H, I)
    wd_t = down_w.T            # (I, H)
    if pad:
        gate_t = jnp.pad(gate_t, ((0, 0), (0, pad)))
        up_t = jnp.pad(up_t, ((0, 0), (0, pad)))
        wd_t = jnp.pad(wd_t, ((0, pad), (0, 0)))

    n_i = inter_pad // tn
    gate_tiles = gate_t.reshape(hidden, n_i, tn).transpose(1, 0, 2)  # (nI,H,tn)
    up_tiles = up_t.reshape(hidden, n_i, tn).transpose(1, 0, 2)      # (nI,H,tn)
    wgu = jnp.concatenate([gate_tiles, up_tiles], axis=-1)           # (nI,H,2tn)
    return wgu, wd_t, tn


def buding_mlp(x, wgu, wd_t, tn, *, tm=None):
    """x: (..., hidden). wgu/wd_t from prepare_buding_mlp_weights."""
    n_i, hidden, two_tn = wgu.shape
    assert two_tn == 2 * tn
    inter_pad = n_i * tn
    assert wd_t.shape == (inter_pad, hidden)

    orig_shape = x.shape
    out_dtype = x.dtype
    xm = x.reshape(-1, hidden)                 # (M, H)
    M = xm.shape[0]
    if xm.dtype != wgu.dtype:
        xm = xm.astype(wgu.dtype)              # MXU operand dtype; acc stays f32

    x_bytes = xm.dtype.itemsize
    w_bytes = wgu.dtype.itemsize
    out_bytes = jnp.dtype(out_dtype).itemsize

    # Row alignment = sublane packing of the activation dtype
    # (f32 -> 8, bf16 -> 16, int8/fp8 -> 32).
    align = max(8, 32 // x_bytes)

    cap = _tpu_vmem_bytes()
    vmem_limit = _vmem_limit_bytes(cap)
    budget = int(vmem_limit * 0.9)             # extra safety for Mosaic scratch

    if tm is None:
        # Prefill target: above the weight-streaming roofline crossover
        # (~560 flops/byte on v6e, ~310 on v7x) -> ~512 rows.
        tm = 512
    # Shrink tm so the double-buffered tile footprint fits the VMEM budget:
    #   fixed   = 2 * H * (2tn + tn) * w_bytes          (wgu + wd, double-buffered)
    #   per_row = H * (2*x_bytes + 2*out_bytes + 4)     (x, out double-buffered + f32 acc)
    # Note the x tile is double-buffered by Pallas even though it is constant
    # along j; it is counted here on purpose.
    fixed = 2 * hidden * (3 * tn) * w_bytes
    per_row = hidden * (2 * x_bytes + 2 * out_bytes + 4)
    avail = max(budget - fixed, per_row * align)
    tm_cap = max(align, (avail // per_row) // align * align)
    tm = max(align, min(tm, tm_cap, _round_up(M, align)))

    grid = (pl.cdiv(M, tm), n_i)               # reduction (I) axis innermost
    kernel = functools.partial(_mlp_kernel, tn=tn)

    out = pl.pallas_call(
        kernel,
        out_shape=jax.ShapeDtypeStruct((M, hidden), out_dtype),
        grid_spec=pltpu.PrefetchScalarGridSpec(
            num_scalar_prefetch=0,
            grid=grid,
            in_specs=[
                pl.BlockSpec((tm, hidden), lambda i, j: (i, 0)),
                # Leading (nI) dim squeezed out of the kernel view.
                pl.BlockSpec((None, hidden, 2 * tn), lambda i, j: (j, 0, 0)),
                pl.BlockSpec((tn, hidden), lambda i, j: (j, 0)),
            ],
            out_specs=pl.BlockSpec((tm, hidden), lambda i, j: (i, 0)),
            scratch_shapes=[pltpu.VMEM((tm, hidden), jnp.float32)],
        ),
        compiler_params=pltpu.CompilerParams(
            dimension_semantics=("parallel", "arbitrary"),
            vmem_limit_bytes=vmem_limit,
        ),
    )(xm, wgu, wd_t)
    return out.reshape(orig_shape)


if __name__ == "__main__":
    # Small config consistent with the module: hidden_size=32, intermediate_size=64
    batch, seq, hidden, inter = 2, 8, 32, 64

    key = jax.random.PRNGKey(0)
    kx, kg, ku, kd = jax.random.split(key, 4)

    x = jax.random.normal(kx, (batch, seq, hidden), dtype=jnp.float32)
    # nn.Linear(in, out, bias=False) weight shape is (out, in)
    gate_w = jax.random.normal(kg, (inter, hidden), dtype=jnp.float32) * 0.05
    up_w = jax.random.normal(ku, (inter, hidden), dtype=jnp.float32) * 0.05
    down_w = jax.random.normal(kd, (hidden, inter), dtype=jnp.float32) * 0.05

    # Plain-JAX reference of the same math.
    g = x @ gate_w.T
    u = x @ up_w.T
    ref = (g * jax.nn.sigmoid(g) * u) @ down_w.T

    # f32 compute path.
    wgu, wd_t, tn = prepare_buding_mlp_weights(gate_w, up_w, down_w)
    out = jax.block_until_ready(buding_mlp(x, wgu, wd_t, tn))
    assert out.shape == x.shape
    assert jnp.allclose(out, ref, atol=1e-4, rtol=1e-4), "f32 mismatch vs reference"

    # bf16 compute path (the production configuration), looser tolerance.
    wgu16, wd16, tn16 = prepare_buding_mlp_weights(
        gate_w, up_w, down_w, compute_dtype=jnp.bfloat16)
    out16 = jax.block_until_ready(buding_mlp(x, wgu16, wd16, tn16))
    assert jnp.allclose(out16.astype(jnp.float32), ref, atol=5e-2, rtol=5e-2), \
        "bf16 mismatch vs reference"

    print("KERNEL_OK")
</pallas_src>

<mosaic_0001>
module attributes {stable_mosaic.version = 11 : i64} {
  func.func @_mlp_kernel(%arg0: i32, %arg1: i32, %arg2: memref<16x32xf32, #tpu.memory_space<vmem>>, %arg3: memref<1x32x128xf32, #tpu.memory_space<vmem>>, %arg4: memref<64x32xf32, #tpu.memory_space<vmem>>, %arg5: memref<16x32xf32, #tpu.memory_space<vmem>>, %arg6: memref<16x32xf32, #tpu.memory_space<vmem>>) attributes {dimension_semantics = [#tpu.dimension_semantics<parallel>, #tpu.dimension_semantics<arbitrary>], iteration_bounds = array<i64: 1, 1>, scalar_prefetch = 0 : i64, scratch_operands = 1 : i64, tpu.core_type = #tpu.core_type<tc>, window_params = [{transform_indices = @transform_0, window_bounds = array<i64: 16, 32>}, {transform_indices = @transform_1, window_bounds = array<i64: 1, 32, 128>}, {transform_indices = @transform_2, window_bounds = array<i64: 64, 32>}, {transform_indices = @transform_3, window_bounds = array<i64: 16, 32>}]} {
    %c0 = arith.constant 0 : index
    %c0_0 = arith.constant 0 : index
    %0 = vector.load %arg2[%c0, %c0_0] : memref<16x32xf32, #tpu.memory_space<vmem>>, vector<16x32xf32>
    %c0_1 = arith.constant 0 : index
    %c0_2 = arith.constant 0 : index
    %c0_3 = arith.constant 0 : index
    %1 = vector.load %arg3[%c0_1, %c0_2, %c0_3] : memref<1x32x128xf32, #tpu.memory_space<vmem>>, vector<1x32x128xf32>
    %2 = vector.shape_cast %1 : vector<1x32x128xf32> to vector<32x128xf32>
    %cst = arith.constant dense<0.000000e+00> : vector<16x128xf32>
    %3 = tpu.matmul %0, %2, %cst {dimension_numbers = #tpu.dot_dimension_numbers<[1], [0], [0], [1], [0, 0, 1, 1], [], []>} : vector<16x32xf32>, vector<32x128xf32>, vector<16x128xf32> -> vector<16x128xf32>
    %4 = vector.extract_strided_slice %3 {offsets = [0, 0], sizes = [16, 64], strides = [1, 1]} : vector<16x128xf32> to vector<16x64xf32>
    %5 = vector.extract_strided_slice %3 {offsets = [0, 64], sizes = [16, 64], strides = [1, 1]} : vector<16x128xf32> to vector<16x64xf32>
    %6 = arith.negf %4 : vector<16x64xf32>
    %7 = math.exp %6 : vector<16x64xf32>
    %cst_4 = arith.constant 1.000000e+00 : f32
    %8 = vector.broadcast %cst_4 : f32 to vector<16x64xf32>
    %9 = arith.addf %8, %7 : vector<16x64xf32>
    %10 = arith.divf %8, %9 : vector<16x64xf32>
    %11 = arith.mulf %4, %10 : vector<16x64xf32>
    %12 = arith.mulf %11, %5 : vector<16x64xf32>
    %c0_5 = arith.constant 0 : index
    %c0_6 = arith.constant 0 : index
    %13 = vector.load %arg4[%c0_5, %c0_6] : memref<64x32xf32, #tpu.memory_space<vmem>>, vector<64x32xf32>
    %cst_7 = arith.constant dense<0.000000e+00> : vector<16x32xf32>
    %14 = tpu.matmul %12, %13, %cst_7 {dimension_numbers = #tpu.dot_dimension_numbers<[1], [0], [0], [1], [0, 0, 1, 1], [], []>} : vector<16x64xf32>, vector<64x32xf32>, vector<16x32xf32> -> vector<16x32xf32>
    %c0_i32 = arith.constant 0 : i32
    %15 = arith.cmpi eq, %arg1, %c0_i32 : i32
    %16 = arith.extui %15 : i1 to i32
    %c0_i32_8 = arith.constant 0 : i32
    %17 = arith.cmpi ne, %16, %c0_i32_8 : i32
    scf.if %17 {
      %c0_13 = arith.constant 0 : index
      %c0_14 = arith.constant 0 : index
      %24 = vector.load %arg6[%c0_13, %c0_14] : memref<16x32xf32, #tpu.memory_space<vmem>>, vector<16x32xf32>
      tpu.vector_store %arg6[%c0_13, %c0_14], %14 {strides = array<i32>} : memref<16x32xf32, #tpu.memory_space<vmem>>, vector<16x32xf32>,
    } else {
    }
    %c0_i32_9 = arith.constant 0 : i32
    %18 = arith.cmpi sgt, %arg1, %c0_i32_9 : i32
    %19 = arith.extui %18 : i1 to i32
    %c0_i32_10 = arith.constant 0 : i32
    %20 = arith.cmpi ne, %19, %c0_i32_10 : i32
    scf.if %20 {
      %c0_13 = arith.constant 0 : index
      %c0_14 = arith.constant 0 : index
      %24 = vector.load %arg6[%c0_13, %c0_14] : memref<16x32xf32, #tpu.memory_space<vmem>>, vector<16x32xf32>
      %25 = arith.addf %24, %14 : vector<16x32xf32>
      %c0_15 = arith.constant 0 : index
      %c0_16 = arith.constant 0 : index
      %26 = vector.load %arg6[%c0_15, %c0_16] : memref<16x32xf32, #tpu.memory_space<vmem>>, vector<16x32xf32>
      tpu.vector_store %arg6[%c0_15, %c0_16], %25 {strides = array<i32>} : memref<16x32xf32, #tpu.memory_space<vmem>>, vector<16x32xf32>,
    } else {
    }
    %c0_i32_11 = arith.constant 0 : i32
    %21 = arith.cmpi eq, %arg1, %c0_i32_11 : i32
    %22 = arith.extui %21 : i1 to i32
    %c0_i32_12 = arith.constant 0 : i32
    %23 = arith.cmpi ne, %22, %c0_i32_12 : i32
    scf.if %23 {
      %c0_13 = arith.constant 0 : index
      %c0_14 = arith.constant 0 : index
      %24 = vector.load %arg6[%c0_13, %c0_14] : memref<16x32xf32, #tpu.memory_space<vmem>>, vector<16x32xf32>
      %c0_15 = arith.constant 0 : index
      %c0_16 = arith.constant 0 : index
      %25 = vector.load %arg5[%c0_15, %c0_16] : memref<16x32xf32, #tpu.memory_space<vmem>>, vector<16x32xf32>
      tpu.vector_store %arg5[%c0_15, %c0_16], %24 {strides = array<i32>} : memref<16x32xf32, #tpu.memory_space<vmem>>, vector<16x32xf32>,
    } else {
    }
    return
  }
  func.func @transform_0(%arg0: i32, %arg1: i32) -> (i32, i32) {
    %c0_i32 = arith.constant 0 : i32
    %c0_i32_0 = arith.constant 0 : i32
    return %arg0, %c0_i32 : i32, i32
  }
  func.func @transform_1(%arg0: i32, %arg1: i32) -> (i32, i32, i32) {
    %c0_i32 = arith.constant 0 : i32
    %c0_i32_0 = arith.constant 0 : i32
    %c0_i32_1 = arith.constant 0 : i32
    return %arg1, %c0_i32, %c0_i32_0 : i32, i32, i32
  }
  func.func @transform_2(%arg0: i32, %arg1: i32) -> (i32, i32) {
    %c0_i32 = arith.constant 0 : i32
    %c0_i32_0 = arith.constant 0 : i32
    return %arg1, %c0_i32 : i32, i32
  }
  func.func @transform_3(%arg0: i32, %arg1: i32) -> (i32, i32) {
    %c0_i32 = arith.constant 0 : i32
    %c0_i32_0 = arith.constant 0 : i32
    return %arg0, %c0_i32 : i32, i32
  }
}

</mosaic_0001>

<llo_original>
// kernel: tpu_custom_call.1
$region0: #{tpu_custom_call.1}
  #allocation0 [shape = 'u32[]', space=smem, size = 0x4, offset = 0x4, fixed_abs, tag = 'smem constant byte address 0x4 - core index']
  #allocation1 [shape = 'u32[144,128]{1,0:T(1,128)}', space=vmem, size = 0x12000, scoped, tag = 'internal scratch']
  #allocation2 [shape = 'f32[16,32]{1,0:T(8,128)}', space=vmem, size = 0x2000, scoped, tag = 'scratch operand']
  %s0 = inlined_call_operand.vmem [shape: f32[16,32], index: 0, kind: input, shape index: {}]
  %s1 = inlined_call_operand.vmem [shape: f32[1,32,128], index: 1, kind: input, shape index: {}]
  %s2 = inlined_call_operand.vmem [shape: f32[64,32], index: 2, kind: input, shape index: {}]
  %s3 = inlined_call_operand.hbm [shape: f32[16,32], index: 3, kind: output, shape index: {}]
  %s4 = sld [smem:[#allocation0]]
  $region34: #{tpu_custom_call.1} parent=0
    _
  %s6 = ssub.s32 1, %s4
  %s7 = scalar_select 0, %s6, %s4
  $region1: #{tpu_custom_call.1} parent=0
    #allocation3 [shape = 'u8[8192]{0}', space=vmem, size = 0x2000, scoped, tag = 'output window, operand 0, single buffered']
    #allocation4 [shape = 's32[1]{0}', space=sflag, size = 0x4, scoped, tag = 'scoped memory for tpu_custom_call.1']
    %8 = vsyncpa [#allocation4], 0
    // Predicated region
    $region2: #{tpu_custom_call.1} parent=1 // pred_check
      _
    $region3: #{tpu_custom_call.1} parent=1 // pred_check_branch
      %10 = sbr.rel (0) target = $region5
    $region4: #{tpu_custom_call.1} parent=1 // pred_region
      _
    $region5: #{tpu_custom_call.1} parent=1 // pred_fallthru
      _
    // Predicated region
    $region6: #{tpu_custom_call.1} parent=1 // pred_check
      _
    $region7: #{tpu_custom_call.1} parent=1 // pred_check_branch
      %12 = sbr.rel (0) target = $region9
    $region8: #{tpu_custom_call.1} parent=1 // pred_region
      _
    $region9: #{tpu_custom_call.1} parent=1 // pred_fallthru
      _
    // Predicated region
    $region10: #{tpu_custom_call.1} parent=1 // pred_check
      _
    $region11: #{tpu_custom_call.1} parent=1 // pred_check_branch
      %14 = sbr.rel (0) target = $region13
    $region12: #{tpu_custom_call.1} parent=1 // pred_region
      _
    $region13: #{tpu_custom_call.1} parent=1 // pred_fallthru
      _
    %v15 = vld [vmem:[%s0] sm:$0xff]
    %v16 = vld [vmem:[%s0 + $0x8] sm:$0xff]
    %v17 = vld [vmem:[%s1] sm:$0xff]
    %v18 = vld [vmem:[%s1 + $0x8] sm:$0xff]
    %v19 = vld [vmem:[%s1 + $0x10] sm:$0xff]
    %v20 = vld [vmem:[%s1 + $0x18] sm:$0xff]
    %vm21 = vcmask 261120
    %v23 = vsel %vm21, %v15, 0
    %v26 = vsel %vm21, %v16, 0
    %28 = vmatprep.subr.mxu0 0.0
    %29 = vmatpush1.msra.mxu0 0.0
    %30 = vmatprep.subr.mxu0 0.0
    %31 = vmatpush1.msra.mxu0 0.0
    %32 = vmatprep.subr.mxu0 0.0
    %33 = vmatpush1.msra.mxu0 0.0
    %34 = vmatprep.subr.mxu0 0.0
    %35 = vmatpush1.msra.mxu0 0.0
    %36 = vmatprep.subr.mxu0 0.0
    %37 = vmatpush1.msra.mxu0 0.0
    %38 = vmatprep.subr.mxu0 0.0
    %39 = vmatpush1.msra.mxu0 0.0
    %40 = vmatprep.subr.mxu0 0.0
    %41 = vmatpush1.msra.mxu0 0.0
    %42 = vmatprep.subr.mxu0 0.0
    %43 = vmatpush1.msra.mxu0 0.0
    %44 = vmatprep.subr.mxu0 0.0
    %45 = vmatpush1.msra.mxu0 0.0
    %46 = vmatprep.subr.mxu0 0.0
    %47 = vmatpush1.msra.mxu0 0.0
    %48 = vmatprep.subr.mxu0 0.0
    %49 = vmatpush1.msra.mxu0 0.0
    %50 = vmatprep.subr.mxu0 0.0
    %51 = vmatpush1.msra.mxu0 0.0
    %52 = vmatprep.subr.mxu0 0.0
    %53 = vmatpush1.msra.mxu0 %v20
    %54 = vmatprep.subr.mxu0 0.0
    %55 = vmatpush1.msra.mxu0 %v19
    %56 = vmatprep.subr.mxu0 0.0
    %57 = vmatpush1.msra.mxu0 %v18
    %58 = vmatprep.subr.mxu0 0.0
    %59 = vmatpush1.msra.mxu0 %v17
    %60 = vmatprep.subr.mxu0 0.0
    %61 = vmatpush2.msra.mxu0 0.0
    %62 = vmatprep.subr.mxu0 0.0
    %63 = vmatpush2.msra.mxu0 0.0
    %64 = vmatprep.subr.mxu0 0.0
    %65 = vmatpush2.msra.mxu0 0.0
    %66 = vmatprep.subr.mxu0 0.0
    %67 = vmatpush2.msra.mxu0 0.0
    %68 = vmatprep.subr.mxu0 0.0
    %69 = vmatpush2.msra.mxu0 0.0
    %70 = vmatprep.subr.mxu0 0.0
    %71 = vmatpush2.msra.mxu0 0.0
    %72 = vmatprep.subr.mxu0 0.0
    %73 = vmatpush2.msra.mxu0 0.0
    %74 = vmatprep.subr.mxu0 0.0
    %75 = vmatpush2.msra.mxu0 0.0
    %76 = vmatprep.subr.mxu0 0.0
    %77 = vmatpush2.msra.mxu0 0.0
    %78 = vmatprep.subr.mxu0 0.0
    %79 = vmatpush2.msra.mxu0 0.0
    %80 = vmatprep.subr.mxu0 0.0
    %81 = vmatpush2.msra.mxu0 0.0
    %82 = vmatprep.subr.mxu0 0.0
    %83 = vmatpush2.msra.mxu0 0.0
    %84 = vmatprep.subr.mxu0 0.0
    %85 = vmatpush2.msra.mxu0 0.0
    %86 = vmatprep.subr.mxu0 0.0
    %87 = vmatpush2.msra.mxu0 0.0
    %88 = vmatprep.subr.mxu0 0.0
    %89 = vmatpush2.msra.mxu0 0.0
    %90 = vmatprep.subr.mxu0 0.0
    %91 = vmatpush2.msra.mxu0 0.0
    %92 = vmatprep.mubr.f32.mxu0 0.0
    %93 = vmatmul.mubr.f32.gmra.mxu0 %v23
    %v94 = vpop.f32.mrf.mxu0
    %v95 = vadd.f32 0.0, %v94
    %v96 = vpop.f32.mrf.mxu0
    %97 = vmatprep.mubr.f32.mxu0 0.0
    %98 = vmatmul.mubr.f32.gmra.mxu0 %v26
    %v99 = vpop.f32.mrf.mxu0
    %v100 = vadd.f32 0.0, %v99
    %v101 = vpop.f32.mrf.mxu0
    %102 = vdwg.mxu0
    %v103 = vxor.u32 %v95, 2147483648
    %v104 = vxor.u32 %v100, 2147483648
    %v105 = vmul.f32 %v103, 1.442695
    %v106 = vpow.pop %v105
    %v107 = vmul.f32 %v104, 1.442695
    %v108 = vpow.pop %v107
    %v109 = vadd.f32 %v106, 1.0
    %v110 = vadd.f32 %v108, 1.0
    %v111 = vrcp.pop %v109
    %v112 = vmul.f32 1.0, %v111
    %v113 = vrcp.pop %v110
    %v114 = vmul.f32 1.0, %v113
    %v115 = vmul.f32 %v95, %v112
    %v116 = vmul.f32 %v100, %v114
    %119 = vrot.lane.b32.xlu0 %v95, 64
    %v120 = vpop.permute.xlu0 %119
    %121 = vrot.lane.b32.xlu0 %v100, 64
    %v122 = vpop.permute.xlu0 %121
    %v125 = vmul.f32 %v115, %v120
    %v126 = vmul.f32 %v116, %v122
    %v127 = vld [vmem:[%s2] sm:$0xff]
    %v128 = vld [vmem:[%s2 + $0x8] sm:$0xff]
    %v129 = vld [vmem:[%s2 + $0x10] sm:$0xff]
    %v130 = vld [vmem:[%s2 + $0x18] sm:$0xff]
    %v131 = vld [vmem:[%s2 + $0x20] sm:$0xff]
    %v132 = vld [vmem:[%s2 + $0x28] sm:$0xff]
    %v133 = vld [vmem:[%s2 + $0x30] sm:$0xff]
    %v134 = vld [vmem:[%s2 + $0x38] sm:$0xff]
    %vm135 = vcmask 523264
    %v137 = vsel %vm135, %v125, 0
    %v140 = vsel %vm135, %v126, 0
    %142 = vmatprep.subr.mxu0 0.0
    %143 = vmatpush1.msra.mxu0 0.0
    %144 = vmatprep.subr.mxu0 0.0
    %145 = vmatpush1.msra.mxu0 0.0
    %146 = vmatprep.subr.mxu0 0.0
    %147 = vmatpush1.msra.mxu0 0.0
    %148 = vmatprep.subr.mxu0 0.0
    %149 = vmatpush1.msra.mxu0 0.0
    %150 = vmatprep.subr.mxu0 0.0
    %151 = vmatpush1.msra.mxu0 0.0
    %152 = vmatprep.subr.mxu0 0.0
    %153 = vmatpush1.msra.mxu0 0.0
    %154 = vmatprep.subr.mxu0 0.0
    %155 = vmatpush1.msra.mxu0 0.0
    %156 = vmatprep.subr.mxu0 0.0
    %157 = vmatpush1.msra.mxu0 0.0
    %158 = vmatprep.subr.mxu0 0.0
    %159 = vmatpush1.msra.mxu0 %v134
    %160 = vmatprep.subr.mxu0 0.0
    %161 = vmatpush1.msra.mxu0 %v133
    %162 = vmatprep.subr.mxu0 0.0
    %163 = vmatpush1.msra.mxu0 %v132
    %164 = vmatprep.subr.mxu0 0.0
    %165 = vmatpush1.msra.mxu0 %v131
    %166 = vmatprep.subr.mxu0 0.0
    %167 = vmatpush1.msra.mxu0 %v130
    %168 = vmatprep.subr.mxu0 0.0
    %169 = vmatpush1.msra.mxu0 %v129
    %170 = vmatprep.subr.mxu0 0.0
    %171 = vmatpush1.msra.mxu0 %v128
    %172 = vmatprep.subr.mxu0 0.0
    %173 = vmatpush1.msra.mxu0 %v127
    %174 = vmatprep.subr.mxu0 0.0
    %175 = vmatpush2.msra.mxu0 0.0
    %176 = vmatprep.subr.mxu0 0.0
    %177 = vmatpush2.msra.mxu0 0.0
    %178 = vmatprep.subr.mxu0 0.0
    %179 = vmatpush2.msra.mxu0 0.0
    %180 = vmatprep.subr.mxu0 0.0
    %181 = vmatpush2.msra.mxu0 0.0
    %182 = vmatprep.subr.mxu0 0.0
    %183 = vmatpush2.msra.mxu0 0.0
    %184 = vmatprep.subr.mxu0 0.0
    %185 = vmatpush2.msra.mxu0 0.0
    %186 = vmatprep.subr.mxu0 0.0
    %187 = vmatpush2.msra.mxu0 0.0
    %188 = vmatprep.subr.mxu0 0.0
    %189 = vmatpush2.msra.mxu0 0.0
    %190 = vmatprep.subr.mxu0 0.0
    %191 = vmatpush2.msra.mxu0 0.0
    %192 = vmatprep.subr.mxu0 0.0
    %193 = vmatpush2.msra.mxu0 0.0
    %194 = vmatprep.subr.mxu0 0.0
    %195 = vmatpush2.msra.mxu0 0.0
    %196 = vmatprep.subr.mxu0 0.0
    %197 = vmatpush2.msra.mxu0 0.0
    %198 = vmatprep.subr.mxu0 0.0
    %199 = vmatpush2.msra.mxu0 0.0
    %200 = vmatprep.subr.mxu0 0.0
    %201 = vmatpush2.msra.mxu0 0.0
    %202 = vmatprep.subr.mxu0 0.0
    %203 = vmatpush2.msra.mxu0 0.0
    %204 = vmatprep.subr.mxu0 0.0
    %205 = vmatpush2.msra.mxu0 0.0
    %206 = vmatprep.mubr.f32.mxu0 0.0
    %207 = vmatmul.mubr.f32.gmra.mxu0 %v137
    %v208 = vpop.f32.mrf.mxu0
    %v209 = vadd.f32 0.0, %v208
    %v210 = vpop.f32.mrf.mxu0
    %211 = vmatprep.mubr.f32.mxu0 0.0
    %212 = vmatmul.mubr.f32.gmra.mxu0 %v140
    %v213 = vpop.f32.mrf.mxu0
    %v214 = vadd.f32 0.0, %v213
    %v215 = vpop.f32.mrf.mxu0
    %216 = vdwg.mxu0
    %p217 = scmp.eq.s32.totalorder 0, 0
    // Predicated region
    $region14: #{tpu_custom_call.1} parent=1 // pred_check
      %p218 = pneg %p217
    $region15: #{tpu_custom_call.1} parent=1 // pred_check_branch
      %220 = sbr.rel (%p218) target = $region17
    $region16: #{tpu_custom_call.1} parent=1 // pred_region
      %221 = vst.msk [vmem:[#allocation2] sm:$0xff] %vm21, %v209
      %222 = vst.msk [vmem:[#allocation2 + $0x8] sm:$0xff] %vm21, %v214
    $region17: #{tpu_custom_call.1} parent=1 // pred_fallthru
      _
    %p223 = scmp.gt.s32.totalorder 0, 0
    // Predicated region
    $region18: #{tpu_custom_call.1} parent=1 // pred_check
      %p224 = pneg %p223
    $region19: #{tpu_custom_call.1} parent=1 // pred_check_branch
      %226 = sbr.rel (%p224) target = $region21
    $region20: #{tpu_custom_call.1} parent=1 // pred_region
      %v227 = vld [vmem:[#allocation2] sm:$0xff]
      %v228 = vld [vmem:[#allocation2 + $0x8] sm:$0xff]
      %v229 = vadd.f32 %v227, %v209
      %v230 = vadd.f32 %v228, %v214
      %231 = vst.msk [vmem:[#allocation2] sm:$0xff] %vm21, %v229
      %232 = vst.msk [vmem:[#allocation2 + $0x8] sm:$0xff] %vm21, %v230
    $region21: #{tpu_custom_call.1} parent=1 // pred_fallthru
      _
    // Predicated region
    $region22: #{tpu_custom_call.1} parent=1 // pred_check
      %p233 = pneg %p217
    $region23: #{tpu_custom_call.1} parent=1 // pred_check_branch
      %235 = sbr.rel (%p233) target = $region25
    $region24: #{tpu_custom_call.1} parent=1 // pred_region
      %v236 = vld [vmem:[#allocation2] sm:$0xff]
      %v237 = vld [vmem:[#allocation2 + $0x8] sm:$0xff]
      %238 = vst.msk [vmem:[#allocation3] sm:$0xff] %vm21, %v236
      %239 = vst.msk [vmem:[#allocation3 + $0x8] sm:$0xff] %vm21, %v237
    $region25: #{tpu_custom_call.1} parent=1 // pred_fallthru
      _
    // Predicated region
    $region26: #{tpu_custom_call.1} parent=1 // pred_check
      _
    $region27: #{tpu_custom_call.1} parent=1 // pred_check_branch
      %241 = sbr.rel (0) target = $region29
    $region28: #{tpu_custom_call.1} parent=1 // pred_region
      %s243 = ssub.s32 256, 256
      %244 = vsyncadd [#allocation4], %s243
      %s245 = sshll.u32 [#allocation3], 4
      %s246 = int_to_ptr.vmem [resolvable:$true] %s245
      %251 = dma.vmem_to_hbm [thread:$0]  %s246, 256, %s3, [#allocation4], 128, 128, 8
    $region29: #{tpu_custom_call.1} parent=1 // pred_fallthru
      _
    // Predicated region
    $region30: #{tpu_custom_call.1} parent=1 // pred_check
      _
    $region31: #{tpu_custom_call.1} parent=1 // pred_check_branch
      %253 = sbr.rel (0) target = $region33
    $region32: #{tpu_custom_call.1} parent=1 // pred_region
      %254 = dma.done [#allocation4], 256
    $region33: #{tpu_custom_call.1} parent=1 // pred_fallthru
      _
    %255 = vsyncpa [#allocation4], 1

</llo_original>
